<compile_context>
chip_gen: v7x
topology: tpu7x:2x2x1
jax: 0.10.0
libtpu: 0.0.40
codegen_flags: <defaults>
</compile_context>

<pallas_src>
import functools

import jax
import jax.numpy as jnp
from jax import lax
from jax.experimental import pallas as pl
from jax.experimental.pallas import tpu as pltpu


def _masked_d2_kernel(pos_col_ref, pos_row_ref, bcol_ref, brow_ref, out_ref,
                      *, cutoff_sq):
    """One (TM, TN) tile of masked squared pairwise distances.

    pos_col_ref : (TM, 3)  f32  center-node coords (padded rows are zero)
    pos_row_ref : (8, TN)  f32  neighbor coords, pre-transposed; rows 0..2=x,y,z
    bcol_ref    : (TM, 1)  i32  batch id per center node, -1 for padding
    brow_ref    : (1, TN)  i32  batch id per neighbor node, -1 for padding
    out_ref     : (TM, TN) f32  d2 if valid radius edge else +inf
    """
    tm, tn = out_ref.shape
    i = pl.program_id(0)
    j = pl.program_id(1)

    pcol = pos_col_ref[...]                     # (TM, 3)
    prow = pos_row_ref[...]                     # (8, TN)

    # Per-coordinate VPU differences (no MXU, no transpose, no cancellation).
    dx = pcol[:, 0:1] - prow[0:1, :]            # (TM, TN)
    dy = pcol[:, 1:2] - prow[1:2, :]
    dz = pcol[:, 2:3] - prow[2:3, :]
    d2 = dx * dx + dy * dy + dz * dz

    bcol = bcol_ref[...]                        # (TM, 1)
    brow = brow_ref[...]                        # (1, TN)
    same_batch = bcol == brow
    real = (bcol >= 0) & (brow >= 0)            # exclude padded nodes

    # Global indices (offset by grid position) so the self-pair test stays
    # correct under tiling.
    ri = i * tm + lax.broadcasted_iota(jnp.int32, (tm, tn), 0)
    ci = j * tn + lax.broadcasted_iota(jnp.int32, (tm, tn), 1)
    not_self = ri != ci

    valid = same_batch & real & not_self & (d2 <= cutoff_sq)
    out_ref[...] = jnp.where(valid, d2, jnp.inf)


def _pick_tile(np_, pref):
    # np_ is a multiple of 128; return the largest multiple of 128 <= pref
    # that divides np_.
    t = min(pref, np_)
    while np_ % t != 0:
        t -= 128
    return t


def _masked_d2_pallas(pos_col, pos_row_t, batch_col, batch_row, cutoff):
    np_ = pos_col.shape[0]
    tm = _pick_tile(np_, 256)   # narrower center tile (vst-friendly on v5e)
    tn = _pick_tile(np_, 512)   # wide, lane-dense output tile
    kernel = functools.partial(_masked_d2_kernel, cutoff_sq=float(cutoff) ** 2)
    return pl.pallas_call(
        kernel,
        out_shape=jax.ShapeDtypeStruct((np_, np_), jnp.float32),
        grid=(np_ // tm, np_ // tn),
        in_specs=[
            pl.BlockSpec((tm, 3), lambda i, j: (i, 0)),   # center coords
            pl.BlockSpec((8, tn), lambda i, j: (0, j)),   # neighbor coords (T)
            pl.BlockSpec((tm, 1), lambda i, j: (i, 0)),   # center batch ids
            pl.BlockSpec((1, tn), lambda i, j: (0, j)),   # neighbor batch ids
        ],
        out_specs=pl.BlockSpec((tm, tn), lambda i, j: (i, j)),
        compiler_params=pltpu.CompilerParams(
            dimension_semantics=("parallel", "parallel")),
    )(pos_col, pos_row_t, batch_col, batch_row)


def radius_interaction_graph(pos, batch, *, cutoff=10.0, max_num_neighbors=32,
                             with_self_loops=True):
    """JAX/Pallas equivalent of RadiusInteractionGraph.forward.

    Returns (edge_index [2, E_max], edge_weight [E_max], edge_mask [E_max])
    where E_max = N * min(max_num_neighbors, N) (+ N self loops).
    """
    n = pos.shape[0]
    np_ = max(128, ((n + 127) // 128) * 128)          # pad node axis for lanes

    pos_f = pos.astype(jnp.float32)
    pos_col = jnp.zeros((np_, 3), jnp.float32).at[:n].set(pos_f)
    # Pre-transposed neighbor coordinates: (8, Np), rows 0..2 real, rest zero.
    pos_row_t = jnp.zeros((8, np_), jnp.float32).at[:3, :n].set(pos_f.T)

    batch_i = batch.astype(jnp.int32)
    batch_col = jnp.full((np_, 1), -1, jnp.int32).at[:n, 0].set(batch_i)
    batch_row = jnp.full((1, np_), -1, jnp.int32).at[0, :n].set(batch_i)

    # (Np, Np) masked squared distances: d2 for valid radius edges, +inf else.
    d2_masked = _masked_d2_pallas(pos_col, pos_row_t, batch_col, batch_row,
                                  cutoff)

    # Up to k nearest in-radius neighbors per node.  Padded rows are all +inf,
    # so we can run top_k on the padded array and slice the small result.
    # TODO(synk): per-row top-k/threshold selection could be fused into the
    # kernel (reduction grid axis + VMEM running top-k) to avoid the O(N^2)
    # HBM round-trip for very large N.
    k = min(int(max_num_neighbors), n)
    neg_top, nbr_idx = lax.top_k(-d2_masked, k)       # (Np, k)
    nbr_d2 = -neg_top[:n]                             # (n, k)
    nbr_idx = nbr_idx[:n]
    nbr_valid = jnp.isfinite(nbr_d2)
    nbr_dist = jnp.where(nbr_valid,
                         jnp.sqrt(jnp.maximum(nbr_d2, 0.0)), 0.0)

    centers = jnp.broadcast_to(jnp.arange(n)[:, None], (n, k))
    # PyG radius_graph (flow='source_to_target'): row = neighbor, col = center.
    row = jnp.where(nbr_valid, nbr_idx, 0).reshape(-1)
    col = centers.reshape(-1)
    weight = nbr_dist.reshape(-1)
    edge_mask = nbr_valid.reshape(-1)

    if with_self_loops:
        loop = jnp.arange(n)
        row = jnp.concatenate([row, loop])
        col = jnp.concatenate([col, loop])
        weight = jnp.concatenate([weight, jnp.zeros((n,), jnp.float32)])
        edge_mask = jnp.concatenate([edge_mask, jnp.ones((n,), bool)])

    edge_index = jnp.stack([row, col]).astype(jnp.int32)
    return edge_index, weight, edge_mask


if __name__ == "__main__":
    key = jax.random.PRNGKey(0)
    n = 16
    pos = jax.random.uniform(key, (n, 3), jnp.float32, minval=0.0, maxval=4.0)
    batch = jnp.concatenate([jnp.zeros((8,), jnp.int32), jnp.ones((8,), jnp.int32)])

    edge_index, edge_weight, edge_mask = radius_interaction_graph(
        pos, batch, cutoff=10.0, max_num_neighbors=32, with_self_loops=True)
    jax.block_until_ready((edge_index, edge_weight, edge_mask))

    # Lightweight correctness check: weights of real edges match ||pos[r]-pos[c]||.
    r, c = edge_index
    ref_w = jnp.linalg.norm(pos[r] - pos[c], axis=-1)
    err = jnp.max(jnp.abs(jnp.where(edge_mask, edge_weight - ref_w, 0.0)))
    assert float(err) < 1e-3, f"edge weight mismatch: {float(err)}"
    # Real edges must connect nodes of the same graph (self loops trivially same).
    assert bool(jnp.all(jnp.where(edge_mask, batch[r] == batch[c], True)))
    # Real non-self edges must be within the cutoff.
    within = jnp.where(edge_mask, edge_weight <= 10.0 + 1e-4, True)
    assert bool(jnp.all(within))

    print("KERNEL_OK")
</pallas_src>

<mosaic_0001>
module attributes {stable_mosaic.version = 11 : i64} {
  func.func @_masked_d2_kernel(%arg0: i32, %arg1: i32, %arg2: memref<128x3xf32, #tpu.memory_space<vmem>>, %arg3: memref<8x128xf32, #tpu.memory_space<vmem>>, %arg4: memref<128x1xi32, #tpu.memory_space<vmem>>, %arg5: memref<1x128xi32, #tpu.memory_space<vmem>>, %arg6: memref<128x128xf32, #tpu.memory_space<vmem>>) attributes {dimension_semantics = [#tpu.dimension_semantics<parallel>, #tpu.dimension_semantics<parallel>], iteration_bounds = array<i64: 1, 1>, scalar_prefetch = 0 : i64, scratch_operands = 0 : i64, tpu.core_type = #tpu.core_type<tc>, window_params = [{transform_indices = @transform_0, window_bounds = array<i64: 128, 3>}, {transform_indices = @transform_1, window_bounds = array<i64: 8, 128>}, {transform_indices = @transform_2, window_bounds = array<i64: 128, 1>}, {transform_indices = @transform_3, window_bounds = array<i64: 1, 128>}, {transform_indices = @transform_4, window_bounds = array<i64: 128, 128>}]} {
    %c0 = arith.constant 0 : index
    %c0_0 = arith.constant 0 : index
    %0 = vector.load %arg2[%c0, %c0_0] : memref<128x3xf32, #tpu.memory_space<vmem>>, vector<128x3xf32>
    %c0_1 = arith.constant 0 : index
    %c0_2 = arith.constant 0 : index
    %1 = vector.load %arg3[%c0_1, %c0_2] : memref<8x128xf32, #tpu.memory_space<vmem>>, vector<8x128xf32>
    %2 = vector.extract_strided_slice %0 {offsets = [0, 0], sizes = [128, 1], strides = [1, 1]} : vector<128x3xf32> to vector<128x1xf32>
    %3 = vector.extract_strided_slice %1 {offsets = [0, 0], sizes = [1, 128], strides = [1, 1]} : vector<8x128xf32> to vector<1x128xf32>
    %4 = vector.broadcast %2 : vector<128x1xf32> to vector<128x128xf32>
    %5 = vector.broadcast %3 : vector<1x128xf32> to vector<128x128xf32>
    %6 = arith.subf %4, %5 : vector<128x128xf32>
    %7 = vector.extract_strided_slice %0 {offsets = [0, 1], sizes = [128, 1], strides = [1, 1]} : vector<128x3xf32> to vector<128x1xf32>
    %8 = vector.extract_strided_slice %1 {offsets = [1, 0], sizes = [1, 128], strides = [1, 1]} : vector<8x128xf32> to vector<1x128xf32>
    %9 = vector.broadcast %7 : vector<128x1xf32> to vector<128x128xf32>
    %10 = vector.broadcast %8 : vector<1x128xf32> to vector<128x128xf32>
    %11 = arith.subf %9, %10 : vector<128x128xf32>
    %12 = vector.extract_strided_slice %0 {offsets = [0, 2], sizes = [128, 1], strides = [1, 1]} : vector<128x3xf32> to vector<128x1xf32>
    %13 = vector.extract_strided_slice %1 {offsets = [2, 0], sizes = [1, 128], strides = [1, 1]} : vector<8x128xf32> to vector<1x128xf32>
    %14 = vector.broadcast %12 : vector<128x1xf32> to vector<128x128xf32>
    %15 = vector.broadcast %13 : vector<1x128xf32> to vector<128x128xf32>
    %16 = arith.subf %14, %15 : vector<128x128xf32>
    %17 = arith.mulf %6, %6 : vector<128x128xf32>
    %18 = arith.mulf %11, %11 : vector<128x128xf32>
    %19 = arith.addf %17, %18 : vector<128x128xf32>
    %20 = arith.mulf %16, %16 : vector<128x128xf32>
    %21 = arith.addf %19, %20 : vector<128x128xf32>
    %c0_3 = arith.constant 0 : index
    %c0_4 = arith.constant 0 : index
    %22 = vector.load %arg4[%c0_3, %c0_4] : memref<128x1xi32, #tpu.memory_space<vmem>>, vector<128x1xi32>
    %c0_5 = arith.constant 0 : index
    %c0_6 = arith.constant 0 : index
    %23 = vector.load %arg5[%c0_5, %c0_6] : memref<1x128xi32, #tpu.memory_space<vmem>>, vector<1x128xi32>
    %24 = vector.broadcast %22 : vector<128x1xi32> to vector<128x128xi32>
    %25 = vector.broadcast %23 : vector<1x128xi32> to vector<128x128xi32>
    %26 = arith.cmpi eq, %24, %25 : vector<128x128xi32>
    %c0_i32 = arith.constant 0 : i32
    %27 = vector.broadcast %c0_i32 : i32 to vector<128x1xi32>
    %28 = arith.cmpi sge, %22, %27 : vector<128x1xi32>
    %c0_i32_7 = arith.constant 0 : i32
    %29 = vector.broadcast %c0_i32_7 : i32 to vector<1x128xi32>
    %30 = arith.cmpi sge, %23, %29 : vector<1x128xi32>
    %31 = vector.broadcast %28 : vector<128x1xi1> to vector<128x128xi1>
    %32 = vector.broadcast %30 : vector<1x128xi1> to vector<128x128xi1>
    %33 = arith.andi %31, %32 : vector<128x128xi1>
    %c128_i32 = arith.constant 128 : i32
    %34 = arith.muli %arg0, %c128_i32 : i32
    %35 = tpu.iota {dimensions = array<i32: 0>} : vector<128x128xi32>
    %36 = vector.broadcast %34 : i32 to vector<128x128xi32>
    %37 = arith.addi %36, %35 : vector<128x128xi32>
    %c128_i32_8 = arith.constant 128 : i32
    %38 = arith.muli %arg1, %c128_i32_8 : i32
    %39 = tpu.iota {dimensions = array<i32: 1>} : vector<128x128xi32>
    %40 = vector.broadcast %38 : i32 to vector<128x128xi32>
    %41 = arith.addi %40, %39 : vector<128x128xi32>
    %42 = arith.cmpi ne, %37, %41 : vector<128x128xi32>
    %43 = arith.andi %26, %33 : vector<128x128xi1>
    %44 = arith.andi %43, %42 : vector<128x128xi1>
    %cst = arith.constant 1.000000e+02 : f32
    %45 = vector.broadcast %cst : f32 to vector<128x128xf32>
    %46 = arith.cmpf ole, %21, %45 : vector<128x128xf32>
    %47 = arith.andi %44, %46 : vector<128x128xi1>
    %cst_9 = arith.constant 0x7F800000 : f32
    %48 = vector.broadcast %cst_9 : f32 to vector<128x128xf32>
    %49 = arith.select %47, %21, %48 : vector<128x128xi1>, vector<128x128xf32>
    %c0_10 = arith.constant 0 : index
    %c0_11 = arith.constant 0 : index
    %50 = vector.load %arg6[%c0_10, %c0_11] : memref<128x128xf32, #tpu.memory_space<vmem>>, vector<128x128xf32>
    tpu.vector_store %arg6[%c0_10, %c0_11], %49 {strides = array<i32>} : memref<128x128xf32, #tpu.memory_space<vmem>>, vector<128x128xf32>,
    return
  }
  func.func @transform_0(%arg0: i32, %arg1: i32) -> (i32, i32) {
    %c0_i32 = arith.constant 0 : i32
    %c0_i32_0 = arith.constant 0 : i32
    return %arg0, %c0_i32 : i32, i32
  }
  func.func @transform_1(%arg0: i32, %arg1: i32) -> (i32, i32) {
    %c0_i32 = arith.constant 0 : i32
    %c0_i32_0 = arith.constant 0 : i32
    return %c0_i32, %arg1 : i32, i32
  }
  func.func @transform_2(%arg0: i32, %arg1: i32) -> (i32, i32) {
    %c0_i32 = arith.constant 0 : i32
    %c0_i32_0 = arith.constant 0 : i32
    return %arg0, %c0_i32 : i32, i32
  }
  func.func @transform_3(%arg0: i32, %arg1: i32) -> (i32, i32) {
    %c0_i32 = arith.constant 0 : i32
    %c0_i32_0 = arith.constant 0 : i32
    return %c0_i32, %arg1 : i32, i32
  }
  func.func @transform_4(%arg0: i32, %arg1: i32) -> (i32, i32) {
    %c0_i32 = arith.constant 0 : i32
    return %arg0, %arg1 : i32, i32
  }
}

</mosaic_0001>

<llo_original>
// kernel: tpu_custom_call.1
$region0: #{tpu_custom_call.1}
  #allocation0 [shape = 'u32[]', space=smem, size = 0x4, offset = 0x4, fixed_abs, tag = 'smem constant byte address 0x4 - core index']
  #allocation1 [shape = 'u32[144,128]{1,0:T(1,128)}', space=vmem, size = 0x12000, scoped, tag = 'internal scratch']
  %s0 = inlined_call_operand.vmem [shape: f32[128,3], index: 0, kind: input, shape index: {}]
  %s1 = inlined_call_operand.vmem [shape: f32[8,128], index: 1, kind: input, shape index: {}]
  %s2 = inlined_call_operand.vmem [shape: s32[128,1], index: 2, kind: input, shape index: {}]
  %s3 = inlined_call_operand.vmem [shape: s32[1,128], index: 3, kind: input, shape index: {}]
  %s4 = inlined_call_operand.hbm [shape: f32[128,128], index: 4, kind: output, shape index: {}]
  %s5 = sld [smem:[#allocation0]]
  $region26: #{tpu_custom_call.1} parent=0
    _
  %s7 = ssub.s32 1, %s5
  %s8 = scalar_select 0, %s7, %s5
  $region1: #{tpu_custom_call.1} parent=0
    #allocation2 [shape = 'u8[65536]{0}', space=vmem, size = 0x10000, scoped, tag = 'output window, operand 0, single buffered']
    #allocation3 [shape = 's32[1]{0}', space=sflag, size = 0x4, scoped, tag = 'scoped memory for tpu_custom_call.1']
    %9 = vsyncpa [#allocation3], 0
    // Predicated region
    $region2: #{tpu_custom_call.1} parent=1 // pred_check
      _
    $region3: #{tpu_custom_call.1} parent=1 // pred_check_branch
      %11 = sbr.rel (0) target = $region5
    $region4: #{tpu_custom_call.1} parent=1 // pred_region
      _
    $region5: #{tpu_custom_call.1} parent=1 // pred_fallthru
      _
    // Predicated region
    $region6: #{tpu_custom_call.1} parent=1 // pred_check
      _
    $region7: #{tpu_custom_call.1} parent=1 // pred_check_branch
      %13 = sbr.rel (0) target = $region9
    $region8: #{tpu_custom_call.1} parent=1 // pred_region
      _
    $region9: #{tpu_custom_call.1} parent=1 // pred_fallthru
      _
    // Predicated region
    $region10: #{tpu_custom_call.1} parent=1 // pred_check
      _
    $region11: #{tpu_custom_call.1} parent=1 // pred_check_branch
      %15 = sbr.rel (0) target = $region13
    $region12: #{tpu_custom_call.1} parent=1 // pred_region
      _
    $region13: #{tpu_custom_call.1} parent=1 // pred_fallthru
      _
    // Predicated region
    $region14: #{tpu_custom_call.1} parent=1 // pred_check
      _
    $region15: #{tpu_custom_call.1} parent=1 // pred_check_branch
      %17 = sbr.rel (0) target = $region17
    $region16: #{tpu_custom_call.1} parent=1 // pred_region
      _
    $region17: #{tpu_custom_call.1} parent=1 // pred_fallthru
      _
    %v18 = vld [vmem:[%s0] sm:$0xff]
    %v19 = vld [vmem:[%s0 + $0x8] sm:$0xff]
    %v20 = vld [vmem:[%s0 + $0x10] sm:$0xff]
    %v21 = vld [vmem:[%s0 + $0x18] sm:$0xff]
    %v22 = vld [vmem:[%s0 + $0x20] sm:$0xff]
    %v23 = vld [vmem:[%s0 + $0x28] sm:$0xff]
    %v24 = vld [vmem:[%s0 + $0x30] sm:$0xff]
    %v25 = vld [vmem:[%s0 + $0x38] sm:$0xff]
    %v26 = vld [vmem:[%s0 + $0x40] sm:$0xff]
    %v27 = vld [vmem:[%s0 + $0x48] sm:$0xff]
    %v28 = vld [vmem:[%s0 + $0x50] sm:$0xff]
    %v29 = vld [vmem:[%s0 + $0x58] sm:$0xff]
    %v30 = vld [vmem:[%s0 + $0x60] sm:$0xff]
    %v31 = vld [vmem:[%s0 + $0x68] sm:$0xff]
    %v32 = vld [vmem:[%s0 + $0x70] sm:$0xff]
    %v33 = vld [vmem:[%s0 + $0x78] sm:$0xff]
    %v34 = vld [vmem:[%s1] sm:$0xff]
    %36 = vset.pattern.permute.xlu0 0
    %37 = vperm.xlu0 %36, %v18
    %v38 = vpop.permute.xlu0 %37
    %41 = vset.pattern.permute.xlu0 0
    %42 = vperm.xlu0 %41, %v19
    %v43 = vpop.permute.xlu0 %42
    %46 = vset.pattern.permute.xlu0 0
    %47 = vperm.xlu0 %46, %v20
    %v48 = vpop.permute.xlu0 %47
    %51 = vset.pattern.permute.xlu0 0
    %52 = vperm.xlu0 %51, %v21
    %v53 = vpop.permute.xlu0 %52
    %56 = vset.pattern.permute.xlu0 0
    %57 = vperm.xlu0 %56, %v22
    %v58 = vpop.permute.xlu0 %57
    %61 = vset.pattern.permute.xlu0 0
    %62 = vperm.xlu0 %61, %v23
    %v63 = vpop.permute.xlu0 %62
    %66 = vset.pattern.permute.xlu0 0
    %67 = vperm.xlu0 %66, %v24
    %v68 = vpop.permute.xlu0 %67
    %71 = vset.pattern.permute.xlu0 0
    %72 = vperm.xlu0 %71, %v25
    %v73 = vpop.permute.xlu0 %72
    %76 = vset.pattern.permute.xlu0 0
    %77 = vperm.xlu0 %76, %v26
    %v78 = vpop.permute.xlu0 %77
    %81 = vset.pattern.permute.xlu0 0
    %82 = vperm.xlu0 %81, %v27
    %v83 = vpop.permute.xlu0 %82
    %86 = vset.pattern.permute.xlu0 0
    %87 = vperm.xlu0 %86, %v28
    %v88 = vpop.permute.xlu0 %87
    %91 = vset.pattern.permute.xlu0 0
    %92 = vperm.xlu0 %91, %v29
    %v93 = vpop.permute.xlu0 %92
    %96 = vset.pattern.permute.xlu0 0
    %97 = vperm.xlu0 %96, %v30
    %v98 = vpop.permute.xlu0 %97
    %101 = vset.pattern.permute.xlu0 0
    %102 = vperm.xlu0 %101, %v31
    %v103 = vpop.permute.xlu0 %102
    %106 = vset.pattern.permute.xlu0 0
    %107 = vperm.xlu0 %106, %v32
    %v108 = vpop.permute.xlu0 %107
    %111 = vset.pattern.permute.xlu0 0
    %112 = vperm.xlu0 %111, %v33
    %v113 = vpop.permute.xlu0 %112
    %v115 = vlaneseq
    %v116 = vshrl.u32 %v115, 7
    %v117 = vsub.s32 0, %v116
    %v118 = vrot.slane %v34, %v117
    %v119 = vsub.f32 %v38, %v118
    %v120 = vsub.f32 %v43, %v118
    %v121 = vsub.f32 %v48, %v118
    %v122 = vsub.f32 %v53, %v118
    %v123 = vsub.f32 %v58, %v118
    %v124 = vsub.f32 %v63, %v118
    %v125 = vsub.f32 %v68, %v118
    %v126 = vsub.f32 %v73, %v118
    %v127 = vsub.f32 %v78, %v118
    %v128 = vsub.f32 %v83, %v118
    %v129 = vsub.f32 %v88, %v118
    %v130 = vsub.f32 %v93, %v118
    %v131 = vsub.f32 %v98, %v118
    %v132 = vsub.f32 %v103, %v118
    %v133 = vsub.f32 %v108, %v118
    %v134 = vsub.f32 %v113, %v118
    %135 = vset.pattern.permute.xlu0 1
    %136 = vperm.xlu0 %135, %v18
    %v137 = vpop.permute.xlu0 %136
    %139 = vset.pattern.permute.xlu0 1
    %140 = vperm.xlu0 %139, %v19
    %v141 = vpop.permute.xlu0 %140
    %143 = vset.pattern.permute.xlu0 1
    %144 = vperm.xlu0 %143, %v20
    %v145 = vpop.permute.xlu0 %144
    %147 = vset.pattern.permute.xlu0 1
    %148 = vperm.xlu0 %147, %v21
    %v149 = vpop.permute.xlu0 %148
    %151 = vset.pattern.permute.xlu0 1
    %152 = vperm.xlu0 %151, %v22
    %v153 = vpop.permute.xlu0 %152
    %155 = vset.pattern.permute.xlu0 1
    %156 = vperm.xlu0 %155, %v23
    %v157 = vpop.permute.xlu0 %156
    %159 = vset.pattern.permute.xlu0 1
    %160 = vperm.xlu0 %159, %v24
    %v161 = vpop.permute.xlu0 %160
    %163 = vset.pattern.permute.xlu0 1
    %164 = vperm.xlu0 %163, %v25
    %v165 = vpop.permute.xlu0 %164
    %167 = vset.pattern.permute.xlu0 1
    %168 = vperm.xlu0 %167, %v26
    %v169 = vpop.permute.xlu0 %168
    %171 = vset.pattern.permute.xlu0 1
    %172 = vperm.xlu0 %171, %v27
    %v173 = vpop.permute.xlu0 %172
    %175 = vset.pattern.permute.xlu0 1
    %176 = vperm.xlu0 %175, %v28
    %v177 = vpop.permute.xlu0 %176
    %179 = vset.pattern.permute.xlu0 1
    %180 = vperm.xlu0 %179, %v29
    %v181 = vpop.permute.xlu0 %180
    %183 = vset.pattern.permute.xlu0 1
    %184 = vperm.xlu0 %183, %v30
    %v185 = vpop.permute.xlu0 %184
    %187 = vset.pattern.permute.xlu0 1
    %188 = vperm.xlu0 %187, %v31
    %v189 = vpop.permute.xlu0 %188
    %191 = vset.pattern.permute.xlu0 1
    %192 = vperm.xlu0 %191, %v32
    %v193 = vpop.permute.xlu0 %192
    %195 = vset.pattern.permute.xlu0 1
    %196 = vperm.xlu0 %195, %v33
    %v197 = vpop.permute.xlu0 %196
    %v199 = vlaneseq
    %v200 = vshrl.u32 %v199, 7
    %v201 = vsub.s32 1, %v200
    %v202 = vrot.slane %v34, %v201
    %v203 = vsub.f32 %v137, %v202
    %v204 = vsub.f32 %v141, %v202
    %v205 = vsub.f32 %v145, %v202
    %v206 = vsub.f32 %v149, %v202
    %v207 = vsub.f32 %v153, %v202
    %v208 = vsub.f32 %v157, %v202
    %v209 = vsub.f32 %v161, %v202
    %v210 = vsub.f32 %v165, %v202
    %v211 = vsub.f32 %v169, %v202
    %v212 = vsub.f32 %v173, %v202
    %v213 = vsub.f32 %v177, %v202
    %v214 = vsub.f32 %v181, %v202
    %v215 = vsub.f32 %v185, %v202
    %v216 = vsub.f32 %v189, %v202
    %v217 = vsub.f32 %v193, %v202
    %v218 = vsub.f32 %v197, %v202
    %219 = vset.pattern.permute.xlu0 2
    %220 = vperm.xlu0 %219, %v18
    %v221 = vpop.permute.xlu0 %220
    %223 = vset.pattern.permute.xlu0 2
    %224 = vperm.xlu0 %223, %v19
    %v225 = vpop.permute.xlu0 %224
    %227 = vset.pattern.permute.xlu0 2
    %228 = vperm.xlu0 %227, %v20
    %v229 = vpop.permute.xlu0 %228
    %231 = vset.pattern.permute.xlu0 2
    %232 = vperm.xlu0 %231, %v21
    %v233 = vpop.permute.xlu0 %232
    %235 = vset.pattern.permute.xlu0 2
    %236 = vperm.xlu0 %235, %v22
    %v237 = vpop.permute.xlu0 %236
    %239 = vset.pattern.permute.xlu0 2
    %240 = vperm.xlu0 %239, %v23
    %v241 = vpop.permute.xlu0 %240
    %243 = vset.pattern.permute.xlu0 2
    %244 = vperm.xlu0 %243, %v24
    %v245 = vpop.permute.xlu0 %244
    %247 = vset.pattern.permute.xlu0 2
    %248 = vperm.xlu0 %247, %v25
    %v249 = vpop.permute.xlu0 %248
    %251 = vset.pattern.permute.xlu0 2
    %252 = vperm.xlu0 %251, %v26
    %v253 = vpop.permute.xlu0 %252
    %255 = vset.pattern.permute.xlu0 2
    %256 = vperm.xlu0 %255, %v27
    %v257 = vpop.permute.xlu0 %256
    %259 = vset.pattern.permute.xlu0 2
    %260 = vperm.xlu0 %259, %v28
    %v261 = vpop.permute.xlu0 %260
    %263 = vset.pattern.permute.xlu0 2
    %264 = vperm.xlu0 %263, %v29
    %v265 = vpop.permute.xlu0 %264
    %267 = vset.pattern.permute.xlu0 2
    %268 = vperm.xlu0 %267, %v30
    %v269 = vpop.permute.xlu0 %268
    %271 = vset.pattern.permute.xlu0 2
    %272 = vperm.xlu0 %271, %v31
    %v273 = vpop.permute.xlu0 %272
    %275 = vset.pattern.permute.xlu0 2
    %276 = vperm.xlu0 %275, %v32
    %v277 = vpop.permute.xlu0 %276
    %279 = vset.pattern.permute.xlu0 2
    %280 = vperm.xlu0 %279, %v33
    %v281 = vpop.permute.xlu0 %280
    %v283 = vlaneseq
    %v284 = vshrl.u32 %v283, 7
    %v285 = vsub.s32 2, %v284
    %v286 = vrot.slane %v34, %v285
    %v287 = vsub.f32 %v221, %v286
    %v288 = vsub.f32 %v225, %v286
    %v289 = vsub.f32 %v229, %v286
    %v290 = vsub.f32 %v233, %v286
    %v291 = vsub.f32 %v237, %v286
    %v292 = vsub.f32 %v241, %v286
    %v293 = vsub.f32 %v245, %v286
    %v294 = vsub.f32 %v249, %v286
    %v295 = vsub.f32 %v253, %v286
    %v296 = vsub.f32 %v257, %v286
    %v297 = vsub.f32 %v261, %v286
    %v298 = vsub.f32 %v265, %v286
    %v299 = vsub.f32 %v269, %v286
    %v300 = vsub.f32 %v273, %v286
    %v301 = vsub.f32 %v277, %v286
    %v302 = vsub.f32 %v281, %v286
    %v303 = vmul.f32 %v119, %v119
    %v304 = vmul.f32 %v120, %v120
    %v305 = vmul.f32 %v121, %v121
    %v306 = vmul.f32 %v122, %v122
    %v307 = vmul.f32 %v123, %v123
    %v308 = vmul.f32 %v124, %v124
    %v309 = vmul.f32 %v125, %v125
    %v310 = vmul.f32 %v126, %v126
    %v311 = vmul.f32 %v127, %v127
    %v312 = vmul.f32 %v128, %v128
    %v313 = vmul.f32 %v129, %v129
    %v314 = vmul.f32 %v130, %v130
    %v315 = vmul.f32 %v131, %v131
    %v316 = vmul.f32 %v132, %v132
    %v317 = vmul.f32 %v133, %v133
    %v318 = vmul.f32 %v134, %v134
    %v319 = vmul.f32 %v203, %v203
    %v320 = vmul.f32 %v204, %v204
    %v321 = vmul.f32 %v205, %v205
    %v322 = vmul.f32 %v206, %v206
    %v323 = vmul.f32 %v207, %v207
    %v324 = vmul.f32 %v208, %v208
    %v325 = vmul.f32 %v209, %v209
    %v326 = vmul.f32 %v210, %v210
    %v327 = vmul.f32 %v211, %v211
    %v328 = vmul.f32 %v212, %v212
    %v329 = vmul.f32 %v213, %v213
    %v330 = vmul.f32 %v214, %v214
    %v331 = vmul.f32 %v215, %v215
    %v332 = vmul.f32 %v216, %v216
    %v333 = vmul.f32 %v217, %v217
    %v334 = vmul.f32 %v218, %v218
    %v335 = vadd.f32 %v303, %v319
    %v336 = vadd.f32 %v304, %v320
    %v337 = vadd.f32 %v305, %v321
    %v338 = vadd.f32 %v306, %v322
    %v339 = vadd.f32 %v307, %v323
    %v340 = vadd.f32 %v308, %v324
    %v341 = vadd.f32 %v309, %v325
    %v342 = vadd.f32 %v310, %v326
    %v343 = vadd.f32 %v311, %v327
    %v344 = vadd.f32 %v312, %v328
    %v345 = vadd.f32 %v313, %v329
    %v346 = vadd.f32 %v314, %v330
    %v347 = vadd.f32 %v315, %v331
    %v348 = vadd.f32 %v316, %v332
    %v349 = vadd.f32 %v317, %v333
    %v350 = vadd.f32 %v318, %v334
    %v351 = vmul.f32 %v287, %v287
    %v352 = vmul.f32 %v288, %v288
    %v353 = vmul.f32 %v289, %v289
    %v354 = vmul.f32 %v290, %v290
    %v355 = vmul.f32 %v291, %v291
    %v356 = vmul.f32 %v292, %v292
    %v357 = vmul.f32 %v293, %v293
    %v358 = vmul.f32 %v294, %v294
    %v359 = vmul.f32 %v295, %v295
    %v360 = vmul.f32 %v296, %v296
    %v361 = vmul.f32 %v297, %v297
    %v362 = vmul.f32 %v298, %v298
    %v363 = vmul.f32 %v299, %v299
    %v364 = vmul.f32 %v300, %v300
    %v365 = vmul.f32 %v301, %v301
    %v366 = vmul.f32 %v302, %v302
    %v367 = vadd.f32 %v335, %v351
    %v368 = vadd.f32 %v336, %v352
    %v369 = vadd.f32 %v337, %v353
    %v370 = vadd.f32 %v338, %v354
    %v371 = vadd.f32 %v339, %v355
    %v372 = vadd.f32 %v340, %v356
    %v373 = vadd.f32 %v341, %v357
    %v374 = vadd.f32 %v342, %v358
    %v375 = vadd.f32 %v343, %v359
    %v376 = vadd.f32 %v344, %v360
    %v377 = vadd.f32 %v345, %v361
    %v378 = vadd.f32 %v346, %v362
    %v379 = vadd.f32 %v347, %v363
    %v380 = vadd.f32 %v348, %v364
    %v381 = vadd.f32 %v349, %v365
    %v382 = vadd.f32 %v350, %v366
    %v383 = vld [vmem:[%s2] sm:$0xff]
    %v384 = vld [vmem:[%s2 + $0x8] sm:$0xff]
    %v385 = vld [vmem:[%s2 + $0x10] sm:$0xff]
    %v386 = vld [vmem:[%s2 + $0x18] sm:$0xff]
    %v387 = vld [vmem:[%s2 + $0x20] sm:$0xff]
    %v388 = vld [vmem:[%s2 + $0x28] sm:$0xff]
    %v389 = vld [vmem:[%s2 + $0x30] sm:$0xff]
    %v390 = vld [vmem:[%s2 + $0x38] sm:$0xff]
    %v391 = vld [vmem:[%s2 + $0x40] sm:$0xff]
    %v392 = vld [vmem:[%s2 + $0x48] sm:$0xff]
    %v393 = vld [vmem:[%s2 + $0x50] sm:$0xff]
    %v394 = vld [vmem:[%s2 + $0x58] sm:$0xff]
    %v395 = vld [vmem:[%s2 + $0x60] sm:$0xff]
    %v396 = vld [vmem:[%s2 + $0x68] sm:$0xff]
    %v397 = vld [vmem:[%s2 + $0x70] sm:$0xff]
    %v398 = vld [vmem:[%s2 + $0x78] sm:$0xff]
    %v399 = vld [vmem:[%s3] sm:$0x1]
    %400 = vset.pattern.permute.xlu0 0
    %401 = vperm.xlu0 %400, %v383
    %v402 = vpop.permute.xlu0 %401
    %403 = vset.pattern.permute.xlu0 0
    %404 = vperm.xlu0 %403, %v384
    %v405 = vpop.permute.xlu0 %404
    %406 = vset.pattern.permute.xlu0 0
    %407 = vperm.xlu0 %406, %v385
    %v408 = vpop.permute.xlu0 %407
    %409 = vset.pattern.permute.xlu0 0
    %410 = vperm.xlu0 %409, %v386
    %v411 = vpop.permute.xlu0 %410
    %412 = vset.pattern.permute.xlu0 0
    %413 = vperm.xlu0 %412, %v387
    %v414 = vpop.permute.xlu0 %413
    %415 = vset.pattern.permute.xlu0 0
    %416 = vperm.xlu0 %415, %v388
    %v417 = vpop.permute.xlu0 %416
    %418 = vset.pattern.permute.xlu0 0
    %419 = vperm.xlu0 %418, %v389
    %v420 = vpop.permute.xlu0 %419
    %421 = vset.pattern.permute.xlu0 0
    %422 = vperm.xlu0 %421, %v390
    %v423 = vpop.permute.xlu0 %422
    %424 = vset.pattern.permute.xlu0 0
    %425 = vperm.xlu0 %424, %v391
    %v426 = vpop.permute.xlu0 %425
    %427 = vset.pattern.permute.xlu0 0
    %428 = vperm.xlu0 %427, %v392
    %v429 = vpop.permute.xlu0 %428
    %430 = vset.pattern.permute.xlu0 0
    %431 = vperm.xlu0 %430, %v393
    %v432 = vpop.permute.xlu0 %431
    %433 = vset.pattern.permute.xlu0 0
    %434 = vperm.xlu0 %433, %v394
    %v435 = vpop.permute.xlu0 %434
    %436 = vset.pattern.permute.xlu0 0
    %437 = vperm.xlu0 %436, %v395
    %v438 = vpop.permute.xlu0 %437
    %439 = vset.pattern.permute.xlu0 0
    %440 = vperm.xlu0 %439, %v396
    %v441 = vpop.permute.xlu0 %440
    %442 = vset.pattern.permute.xlu0 0
    %443 = vperm.xlu0 %442, %v397
    %v444 = vpop.permute.xlu0 %443
    %445 = vset.pattern.permute.xlu0 0
    %446 = vperm.xlu0 %445, %v398
    %v447 = vpop.permute.xlu0 %446
    %v448 = vlaneseq
    %v449 = vshrl.u32 %v448, 7
    %v450 = vsub.s32 0, %v449
    %v451 = vrot.slane %v399, %v450
    %vm452 = vcmp.eq.s32.totalorder %v402, %v451
    %vm453 = vcmp.eq.s32.totalorder %v405, %v451
    %vm454 = vcmp.eq.s32.totalorder %v408, %v451
    %vm455 = vcmp.eq.s32.totalorder %v411, %v451
    %vm456 = vcmp.eq.s32.totalorder %v414, %v451
    %vm457 = vcmp.eq.s32.totalorder %v417, %v451
    %vm458 = vcmp.eq.s32.totalorder %v420, %v451
    %vm459 = vcmp.eq.s32.totalorder %v423, %v451
    %vm460 = vcmp.eq.s32.totalorder %v426, %v451
    %vm461 = vcmp.eq.s32.totalorder %v429, %v451
    %vm462 = vcmp.eq.s32.totalorder %v432, %v451
    %vm463 = vcmp.eq.s32.totalorder %v435, %v451
    %vm464 = vcmp.eq.s32.totalorder %v438, %v451
    %vm465 = vcmp.eq.s32.totalorder %v441, %v451
    %vm466 = vcmp.eq.s32.totalorder %v444, %v451
    %vm467 = vcmp.eq.s32.totalorder %v447, %v451
    %vm468 = vcmp.ge.s32.totalorder %v383, 0
    %vm469 = vcmp.ge.s32.totalorder %v384, 0
    %vm470 = vcmp.ge.s32.totalorder %v385, 0
    %vm471 = vcmp.ge.s32.totalorder %v386, 0
    %vm472 = vcmp.ge.s32.totalorder %v387, 0
    %vm473 = vcmp.ge.s32.totalorder %v388, 0
    %vm474 = vcmp.ge.s32.totalorder %v389, 0
    %vm475 = vcmp.ge.s32.totalorder %v390, 0
    %vm476 = vcmp.ge.s32.totalorder %v391, 0
    %vm477 = vcmp.ge.s32.totalorder %v392, 0
    %vm478 = vcmp.ge.s32.totalorder %v393, 0
    %vm479 = vcmp.ge.s32.totalorder %v394, 0
    %vm480 = vcmp.ge.s32.totalorder %v395, 0
    %vm481 = vcmp.ge.s32.totalorder %v396, 0
    %vm482 = vcmp.ge.s32.totalorder %v397, 0
    %vm483 = vcmp.ge.s32.totalorder %v398, 0
    %vm484 = vcmp.ge.s32.totalorder %v399, 0
    %v485 = vsel %vm468, 1, 0
    %v486 = vsel %vm469, 1, 0
    %v487 = vsel %vm470, 1, 0
    %v488 = vsel %vm471, 1, 0
    %v489 = vsel %vm472, 1, 0
    %v490 = vsel %vm473, 1, 0
    %v491 = vsel %vm474, 1, 0
    %v492 = vsel %vm475, 1, 0
    %v493 = vsel %vm476, 1, 0
    %v494 = vsel %vm477, 1, 0
    %v495 = vsel %vm478, 1, 0
    %v496 = vsel %vm479, 1, 0
    %v497 = vsel %vm480, 1, 0
    %v498 = vsel %vm481, 1, 0
    %v499 = vsel %vm482, 1, 0
    %v500 = vsel %vm483, 1, 0
    %501 = vset.pattern.permute.xlu0 0
    %502 = vperm.xlu0 %501, %v485
    %v503 = vpop.permute.xlu0 %502
    %504 = vset.pattern.permute.xlu0 0
    %505 = vperm.xlu0 %504, %v486
    %v506 = vpop.permute.xlu0 %505
    %507 = vset.pattern.permute.xlu0 0
    %508 = vperm.xlu0 %507, %v487
    %v509 = vpop.permute.xlu0 %508
    %510 = vset.pattern.permute.xlu0 0
    %511 = vperm.xlu0 %510, %v488
    %v512 = vpop.permute.xlu0 %511
    %513 = vset.pattern.permute.xlu0 0
    %514 = vperm.xlu0 %513, %v489
    %v515 = vpop.permute.xlu0 %514
    %516 = vset.pattern.permute.xlu0 0
    %517 = vperm.xlu0 %516, %v490
    %v518 = vpop.permute.xlu0 %517
    %519 = vset.pattern.permute.xlu0 0
    %520 = vperm.xlu0 %519, %v491
    %v521 = vpop.permute.xlu0 %520
    %522 = vset.pattern.permute.xlu0 0
    %523 = vperm.xlu0 %522, %v492
    %v524 = vpop.permute.xlu0 %523
    %525 = vset.pattern.permute.xlu0 0
    %526 = vperm.xlu0 %525, %v493
    %v527 = vpop.permute.xlu0 %526
    %528 = vset.pattern.permute.xlu0 0
    %529 = vperm.xlu0 %528, %v494
    %v530 = vpop.permute.xlu0 %529
    %531 = vset.pattern.permute.xlu0 0
    %532 = vperm.xlu0 %531, %v495
    %v533 = vpop.permute.xlu0 %532
    %534 = vset.pattern.permute.xlu0 0
    %535 = vperm.xlu0 %534, %v496
    %v536 = vpop.permute.xlu0 %535
    %537 = vset.pattern.permute.xlu0 0
    %538 = vperm.xlu0 %537, %v497
    %v539 = vpop.permute.xlu0 %538
    %540 = vset.pattern.permute.xlu0 0
    %541 = vperm.xlu0 %540, %v498
    %v542 = vpop.permute.xlu0 %541
    %543 = vset.pattern.permute.xlu0 0
    %544 = vperm.xlu0 %543, %v499
    %v545 = vpop.permute.xlu0 %544
    %546 = vset.pattern.permute.xlu0 0
    %547 = vperm.xlu0 %546, %v500
    %v548 = vpop.permute.xlu0 %547
    %vm549 = vcmp.eq.s32.totalorder %v503, 1
    %vm550 = vcmp.eq.s32.totalorder %v506, 1
    %vm551 = vcmp.eq.s32.totalorder %v509, 1
    %vm552 = vcmp.eq.s32.totalorder %v512, 1
    %vm553 = vcmp.eq.s32.totalorder %v515, 1
    %vm554 = vcmp.eq.s32.totalorder %v518, 1
    %vm555 = vcmp.eq.s32.totalorder %v521, 1
    %vm556 = vcmp.eq.s32.totalorder %v524, 1
    %vm557 = vcmp.eq.s32.totalorder %v527, 1
    %vm558 = vcmp.eq.s32.totalorder %v530, 1
    %vm559 = vcmp.eq.s32.totalorder %v533, 1
    %vm560 = vcmp.eq.s32.totalorder %v536, 1
    %vm561 = vcmp.eq.s32.totalorder %v539, 1
    %vm562 = vcmp.eq.s32.totalorder %v542, 1
    %vm563 = vcmp.eq.s32.totalorder %v545, 1
    %vm564 = vcmp.eq.s32.totalorder %v548, 1
    %v565 = vsel %vm484, 1, 0
    %v566 = vlaneseq
    %v567 = vshrl.u32 %v566, 7
    %v568 = vsub.s32 0, %v567
    %v569 = vrot.slane %v565, %v568
    %vm570 = vcmp.eq.s32.totalorder %v569, 1
    %vm571 = vmand %vm549, %vm570
    %vm572 = vmand %vm550, %vm570
    %vm573 = vmand %vm551, %vm570
    %vm574 = vmand %vm552, %vm570
    %vm575 = vmand %vm553, %vm570
    %vm576 = vmand %vm554, %vm570
    %vm577 = vmand %vm555, %vm570
    %vm578 = vmand %vm556, %vm570
    %vm579 = vmand %vm557, %vm570
    %vm580 = vmand %vm558, %vm570
    %vm581 = vmand %vm559, %vm570
    %vm582 = vmand %vm560, %vm570
    %vm583 = vmand %vm561, %vm570
    %vm584 = vmand %vm562, %vm570
    %vm585 = vmand %vm563, %vm570
    %vm586 = vmand %vm564, %vm570
    %s587 = smul.u32 0, 128
    %v588 = vlaneseq
    %v589 = vshrl.u32 %v588, 7
    %v590 = vadd.s32 %v589, 8
    %v591 = vadd.s32 %v589, 16
    %v592 = vadd.s32 %v589, 24
    %v593 = vadd.s32 %v589, 32
    %v594 = vadd.s32 %v589, 40
    %v595 = vadd.s32 %v589, 48
    %v596 = vadd.s32 %v589, 56
    %v597 = vadd.s32 %v589, 64
    %v598 = vadd.s32 %v589, 72
    %v599 = vadd.s32 %v589, 80
    %v600 = vadd.s32 %v589, 88
    %v601 = vadd.s32 %v589, 96
    %v602 = vadd.s32 %v589, 104
    %v603 = vadd.s32 %v589, 112
    %v604 = vadd.s32 %v589, 120
    %v605 = vstv %s587
    %v606 = vadd.s32 %v605, %v589
    %v607 = vadd.s32 %v605, %v590
    %v608 = vadd.s32 %v605, %v591
    %v609 = vadd.s32 %v605, %v592
    %v610 = vadd.s32 %v605, %v593
    %v611 = vadd.s32 %v605, %v594
    %v612 = vadd.s32 %v605, %v595
    %v613 = vadd.s32 %v605, %v596
    %v614 = vadd.s32 %v605, %v597
    %v615 = vadd.s32 %v605, %v598
    %v616 = vadd.s32 %v605, %v599
    %v617 = vadd.s32 %v605, %v600
    %v618 = vadd.s32 %v605, %v601
    %v619 = vadd.s32 %v605, %v602
    %v620 = vadd.s32 %v605, %v603
    %v621 = vadd.s32 %v605, %v604
    %s622 = smul.u32 0, 128
    %v623 = vlaneseq
    %v624 = vand.u32 %v623, 127
    %v625 = vstv %s622
    %v626 = vadd.s32 %v625, %v624
    %vm627 = vcmp.ne.s32.totalorder %v606, %v626
    %vm628 = vcmp.ne.s32.totalorder %v607, %v626
    %vm629 = vcmp.ne.s32.totalorder %v608, %v626
    %vm630 = vcmp.ne.s32.totalorder %v609, %v626
    %vm631 = vcmp.ne.s32.totalorder %v610, %v626
    %vm632 = vcmp.ne.s32.totalorder %v611, %v626
    %vm633 = vcmp.ne.s32.totalorder %v612, %v626
    %vm634 = vcmp.ne.s32.totalorder %v613, %v626
    %vm635 = vcmp.ne.s32.totalorder %v614, %v626
    %vm636 = vcmp.ne.s32.totalorder %v615, %v626
    %vm637 = vcmp.ne.s32.totalorder %v616, %v626
    %vm638 = vcmp.ne.s32.totalorder %v617, %v626
    %vm639 = vcmp.ne.s32.totalorder %v618, %v626
    %vm640 = vcmp.ne.s32.totalorder %v619, %v626
    %vm641 = vcmp.ne.s32.totalorder %v620, %v626
    %vm642 = vcmp.ne.s32.totalorder %v621, %v626
    %vm643 = vmand %vm452, %vm571
    %vm644 = vmand %vm453, %vm572
    %vm645 = vmand %vm454, %vm573
    %vm646 = vmand %vm455, %vm574
    %vm647 = vmand %vm456, %vm575
    %vm648 = vmand %vm457, %vm576
    %vm649 = vmand %vm458, %vm577
    %vm650 = vmand %vm459, %vm578
    %vm651 = vmand %vm460, %vm579
    %vm652 = vmand %vm461, %vm580
    %vm653 = vmand %vm462, %vm581
    %vm654 = vmand %vm463, %vm582
    %vm655 = vmand %vm464, %vm583
    %vm656 = vmand %vm465, %vm584
    %vm657 = vmand %vm466, %vm585
    %vm658 = vmand %vm467, %vm586
    %vm659 = vmand %vm643, %vm627
    %vm660 = vmand %vm644, %vm628
    %vm661 = vmand %vm645, %vm629
    %vm662 = vmand %vm646, %vm630
    %vm663 = vmand %vm647, %vm631
    %vm664 = vmand %vm648, %vm632
    %vm665 = vmand %vm649, %vm633
    %vm666 = vmand %vm650, %vm634
    %vm667 = vmand %vm651, %vm635
    %vm668 = vmand %vm652, %vm636
    %vm669 = vmand %vm653, %vm637
    %vm670 = vmand %vm654, %vm638
    %vm671 = vmand %vm655, %vm639
    %vm672 = vmand %vm656, %vm640
    %vm673 = vmand %vm657, %vm641
    %vm674 = vmand %vm658, %vm642
    %vm675 = vcmp.le.f32.partialorder %v367, 100.0
    %vm676 = vcmp.le.f32.partialorder %v368, 100.0
    %vm677 = vcmp.le.f32.partialorder %v369, 100.0
    %vm678 = vcmp.le.f32.partialorder %v370, 100.0
    %vm679 = vcmp.le.f32.partialorder %v371, 100.0
    %vm680 = vcmp.le.f32.partialorder %v372, 100.0
    %vm681 = vcmp.le.f32.partialorder %v373, 100.0
    %vm682 = vcmp.le.f32.partialorder %v374, 100.0
    %vm683 = vcmp.le.f32.partialorder %v375, 100.0
    %vm684 = vcmp.le.f32.partialorder %v376, 100.0
    %vm685 = vcmp.le.f32.partialorder %v377, 100.0
    %vm686 = vcmp.le.f32.partialorder %v378, 100.0
    %vm687 = vcmp.le.f32.partialorder %v379, 100.0
    %vm688 = vcmp.le.f32.partialorder %v380, 100.0
    %vm689 = vcmp.le.f32.partialorder %v381, 100.0
    %vm690 = vcmp.le.f32.partialorder %v382, 100.0
    %vm691 = vmand %vm659, %vm675
    %vm692 = vmand %vm660, %vm676
    %vm693 = vmand %vm661, %vm677
    %vm694 = vmand %vm662, %vm678
    %vm695 = vmand %vm663, %vm679
    %vm696 = vmand %vm664, %vm680
    %vm697 = vmand %vm665, %vm681
    %vm698 = vmand %vm666, %vm682
    %vm699 = vmand %vm667, %vm683
    %vm700 = vmand %vm668, %vm684
    %vm701 = vmand %vm669, %vm685
    %vm702 = vmand %vm670, %vm686
    %vm703 = vmand %vm671, %vm687
    %vm704 = vmand %vm672, %vm688
    %vm705 = vmand %vm673, %vm689
    %vm706 = vmand %vm674, %vm690
    %v707 = vsel %vm691, %v367, inf
    %v708 = vsel %vm692, %v368, inf
    %v709 = vsel %vm693, %v369, inf
    %v710 = vsel %vm694, %v370, inf
    %v711 = vsel %vm695, %v371, inf
    %v712 = vsel %vm696, %v372, inf
    %v713 = vsel %vm697, %v373, inf
    %v714 = vsel %vm698, %v374, inf
    %v715 = vsel %vm699, %v375, inf
    %v716 = vsel %vm700, %v376, inf
    %v717 = vsel %vm701, %v377, inf
    %v718 = vsel %vm702, %v378, inf
    %v719 = vsel %vm703, %v379, inf
    %v720 = vsel %vm704, %v380, inf
    %v721 = vsel %vm705, %v381, inf
    %v722 = vsel %vm706, %v382, inf
    %723 = vst [vmem:[#allocation2] sm:$0xff] %v707
    %724 = vst [vmem:[#allocation2 + $0x8] sm:$0xff] %v708
    %725 = vst [vmem:[#allocation2 + $0x10] sm:$0xff] %v709
    %726 = vst [vmem:[#allocation2 + $0x18] sm:$0xff] %v710
    %727 = vst [vmem:[#allocation2 + $0x20] sm:$0xff] %v711
    %728 = vst [vmem:[#allocation2 + $0x28] sm:$0xff] %v712
    %729 = vst [vmem:[#allocation2 + $0x30] sm:$0xff] %v713
    %730 = vst [vmem:[#allocation2 + $0x38] sm:$0xff] %v714
    %731 = vst [vmem:[#allocation2 + $0x40] sm:$0xff] %v715
    %732 = vst [vmem:[#allocation2 + $0x48] sm:$0xff] %v716
    %733 = vst [vmem:[#allocation2 + $0x50] sm:$0xff] %v717
    %734 = vst [vmem:[#allocation2 + $0x58] sm:$0xff] %v718
    %735 = vst [vmem:[#allocation2 + $0x60] sm:$0xff] %v719
    %736 = vst [vmem:[#allocation2 + $0x68] sm:$0xff] %v720
    %737 = vst [vmem:[#allocation2 + $0x70] sm:$0xff] %v721
    %738 = vst [vmem:[#allocation2 + $0x78] sm:$0xff] %v722
    // Predicated region
    $region18: #{tpu_custom_call.1} parent=1 // pred_check
      _
    $region19: #{tpu_custom_call.1} parent=1 // pred_check_branch
      %740 = sbr.rel (0) target = $region21
    $region20: #{tpu_custom_call.1} parent=1 // pred_region
      %s742 = ssub.s32 2048, 2048
      %743 = vsyncadd [#allocation3], %s742
      %s744 = sshll.u32 [#allocation2], 4
      %s745 = int_to_ptr.vmem [resolvable:$true] %s744
      %750 = dma.vmem_to_hbm [thread:$0]  %s745, 2048, %s4, [#allocation3], 128, 128, 8
    $region21: #{tpu_custom_call.1} parent=1 // pred_fallthru
      _
    // Predicated region
    $region22: #{tpu_custom_call.1} parent=1 // pred_check
      _
    $region23: #{tpu_custom_call.1} parent=1 // pred_check_branch
      %752 = sbr.rel (0) target = $region25
    $region24: #{tpu_custom_call.1} parent=1 // pred_region
      %753 = dma.done [#allocation3], 2048
    $region25: #{tpu_custom_call.1} parent=1 // pred_fallthru
      _
    %754 = vsyncpa [#allocation3], 1

</llo_original>
